<compile_context>
chip_gen: v5e
topology: v5e:2x2
jax: 0.10.0
libtpu: 0.0.40
codegen_flags: <defaults>
</compile_context>

<pallas_src>
import jax
import jax.numpy as jnp
from jax.experimental import pallas as pl
from jax.experimental.pallas import tpu as pltpu

BN_EPS = 1e-5
LANE = 128                          # feature dims padded to multiples of the lane width
TM_MAX = 512                        # row-tile cap (safe for v5e/v6e/v7x VMEM budgets)
VMEM_LIMIT_BYTES = 48 * 1024 * 1024  # explicit scoped-VMEM cap, below v7x's 64 MiB physical


def _round_up(x, m):
    return ((x + m - 1) // m) * m


# ---------------- fused stage kernel ----------------

def _make_stage_kernel(*, n_valid, tm, grid_n, apply_bn, add_bias, compute_stats):
    needs_mask = (n_valid % tm) != 0

    def kernel(*refs):
        it = iter(refs)
        x_ref = next(it)
        w_ref = next(it)
        if apply_bn:
            stats_ref = next(it)      # (2, Cin): row 0 = mean, row 1 = rstd
            gamma_ref = next(it)
            beta_ref = next(it)
        if add_bias:
            bias_ref = next(it)
        h_ref = next(it)
        if compute_stats:
            stats_out_ref = next(it)
            sum_ref = next(it)
            ssq_ref = next(it)

        i = pl.program_id(0)

        z = x_ref[...]
        if apply_bn:
            # y = (x - mean) * rstd * gamma + beta  ==  x * scale + shift   (hoisted [1,C] math)
            scale = stats_ref[1:2, :] * gamma_ref[...]
            shift = beta_ref[...] - stats_ref[0:1, :] * scale
            z = jnp.maximum(z.astype(jnp.float32) * scale + shift, 0.0)   # ReLU
            # TODO(synk): F.dropout(p=0.5) of the torch module is treated as identity
            # (deterministic); torch's RNG dropout mask has no reproducible equivalent.
        if needs_mask:
            # Emulates x[:n_valid] slicing and keeps the next BN's stats exact:
            # masked rows contribute zero to the matmul output and to sum/sumsq.
            rows = i * tm + jax.lax.broadcasted_iota(jnp.int32, (tm, 1), 0)
            z = jnp.where(rows < n_valid, z, jnp.zeros_like(z))

        h = jnp.dot(z.astype(jnp.bfloat16), w_ref[...],
                    preferred_element_type=jnp.float32)
        if add_bias:
            h = h + bias_ref[...]
        h_store = h.astype(h_ref.dtype)
        h_ref[...] = h_store

        if compute_stats:
            hf = h_store.astype(jnp.float32)   # stats on exactly the stored values

            @pl.when(i == 0)
            def _init():
                sum_ref[...] = jnp.zeros_like(sum_ref)
                ssq_ref[...] = jnp.zeros_like(ssq_ref)

            sum_ref[...] = sum_ref[...] + jnp.sum(hf, axis=0, keepdims=True)
            ssq_ref[...] = ssq_ref[...] + jnp.sum(hf * hf, axis=0, keepdims=True)

            @pl.when(i == grid_n - 1)
            def _finalize():
                inv_n = jnp.float32(1.0 / n_valid)
                mean = sum_ref[...] * inv_n
                var = jnp.maximum(ssq_ref[...] * inv_n - mean * mean, 0.0)
                stats_out_ref[0:1, :] = mean
                stats_out_ref[1:2, :] = jax.lax.rsqrt(var + BN_EPS)

    return kernel


def _fused_stage(x, w, *, n_valid, tm, stats=None, gamma=None, beta=None,
                 bias=None, compute_stats=False, out_dtype=jnp.bfloat16):
    grid_n = pl.cdiv(n_valid, tm)
    cin, cout = w.shape
    apply_bn = stats is not None
    add_bias = bias is not None

    in_specs = [
        pl.BlockSpec((tm, cin), lambda i: (i, 0)),     # activation row tile (pipelined)
        pl.BlockSpec((cin, cout), lambda i: (0, 0)),   # weight: VMEM-resident across the grid
    ]
    inputs = [x, w]
    if apply_bn:
        in_specs += [pl.BlockSpec((2, cin), lambda i: (0, 0)),
                     pl.BlockSpec((1, cin), lambda i: (0, 0)),
                     pl.BlockSpec((1, cin), lambda i: (0, 0))]
        inputs += [stats, gamma, beta]
    if add_bias:
        in_specs.append(pl.BlockSpec((1, cout), lambda i: (0, 0)))
        inputs.append(bias)

    out_shapes = [jax.ShapeDtypeStruct((grid_n * tm, cout), out_dtype)]
    out_specs = [pl.BlockSpec((tm, cout), lambda i: (i, 0))]
    scratch_shapes = []
    if compute_stats:
        out_shapes.append(jax.ShapeDtypeStruct((2, cout), jnp.float32))
        out_specs.append(pl.BlockSpec((2, cout), lambda i: (0, 0)))   # resident accumor output
        scratch_shapes += [pltpu.VMEM((1, cout), jnp.float32),        # column sum
                           pltpu.VMEM((1, cout), jnp.float32)]        # column sum of squares

    kernel = _make_stage_kernel(n_valid=n_valid, tm=tm, grid_n=grid_n,
                                apply_bn=apply_bn, add_bias=add_bias,
                                compute_stats=compute_stats)

    # Stats accumulation makes the row axis a reduction -> "arbitrary";
    # the bias-only final stage is embarrassingly parallel (v7x megacore).
    semantics = ("arbitrary",) if compute_stats else ("parallel",)

    results = pl.pallas_call(
        kernel,
        out_shape=out_shapes,
        grid_spec=pltpu.PrefetchScalarGridSpec(
            num_scalar_prefetch=0,
            grid=(grid_n,),
            in_specs=in_specs,
            out_specs=out_specs,
            scratch_shapes=scratch_shapes),
        compiler_params=pltpu.CompilerParams(
            dimension_semantics=semantics,
            vmem_limit_bytes=VMEM_LIMIT_BYTES),
    )(*inputs)

    if compute_stats:
        return results[0], results[1]
    return results[0], None


# ---------------- parameter init (deterministic, synthetic, lane-padded) ----------------

def init_encoder_params(key, in_channels, hidden_channels, out_channels, num_layers=2):
    in_p = _round_up(in_channels, LANE)
    hid_p = _round_up(hidden_channels, LANE)
    out_p = _round_up(out_channels, LANE)

    def pad_w(w, rows, cols):   # zero-pad to lane-aligned shape, store bf16 (MXU inputs)
        return jnp.pad(w, ((0, rows - w.shape[0]), (0, cols - w.shape[1]))).astype(jnp.bfloat16)

    params = {}
    keys = jax.random.split(key, num_layers + 3)
    dims_in = [(in_channels, in_p)] + [(hidden_channels, hid_p)] * (num_layers - 1)
    for i in range(num_layers):
        d, dp = dims_in[i]
        w = 0.1 * jax.random.normal(keys[i], (d, hidden_channels), jnp.float32)
        params[f"skip_w_{i}"] = pad_w(w, dp, hid_p)
        # skip bias omitted: exactly cancelled by the following BatchNorm's mean subtraction
        params[f"norm_g_{i}"] = jnp.ones((1, hid_p), jnp.float32)
        params[f"norm_b_{i}"] = jnp.zeros((1, hid_p), jnp.float32)

    w1 = 0.1 * jax.random.normal(keys[num_layers], (hidden_channels, hidden_channels), jnp.float32)
    params["mlp_w1"] = pad_w(w1, hid_p, hid_p)    # its bias is also cancelled by the BN that follows
    params["mlp_g"] = jnp.ones((1, hid_p), jnp.float32)
    params["mlp_beta"] = jnp.zeros((1, hid_p), jnp.float32)
    w2 = 0.1 * jax.random.normal(keys[num_layers + 1], (hidden_channels, out_channels), jnp.float32)
    params["mlp_w2"] = pad_w(w2, hid_p, out_p)
    b2 = 0.1 * jax.random.normal(keys[num_layers + 2], (1, out_channels), jnp.float32)
    params["mlp_b2"] = jnp.pad(b2, ((0, 0), (0, out_p - out_channels))).astype(jnp.float32)
    return params


# ---------------- model forward (== Model.forward -> encoder_pred) ----------------

def model_forward(params, x, adj_sizes, hidden_channels, out_channels):
    """adj_sizes plays the role of the static [adj_t.size(0) for adj_t in adjs_t]."""
    num_layers = len(adj_sizes)
    tm = min(TM_MAX, _round_up(max(adj_sizes), 16))   # 16-aligned rows: bf16 sublane friendly

    in_p = params["skip_w_0"].shape[0]
    n0 = adj_sizes[0]
    rows0 = pl.cdiv(n0, tm) * tm
    # Pad input once: rows -> row-tile multiple, features -> lane multiple; cast to bf16.
    xs = x[:min(x.shape[0], rows0)]
    h = jnp.pad(xs, ((0, rows0 - xs.shape[0]), (0, in_p - xs.shape[1]))).astype(jnp.bfloat16)

    # TODO(synk): per-relation GATConv message passing over SparseTensor adjacencies is
    # omitted: with the default base_model (!= 'rgat') self.convs is empty, and
    # SparseTensor.masked_select_nnz has no clean Pallas equivalent.
    stats = gamma = beta = None
    for i in range(num_layers):
        n = adj_sizes[i]
        # fused: [BN_{i-1} + ReLU (+dropout as identity)] -> skips[i] matmul -> BN_i stats
        h, stats = _fused_stage(h, params[f"skip_w_{i}"], n_valid=n, tm=tm,
                                stats=stats, gamma=gamma, beta=beta, compute_stats=True)
        gamma, beta = params[f"norm_g_{i}"], params[f"norm_b_{i}"]

    n_last = adj_sizes[-1]
    # mlp: Linear -> BN -> ReLU -> Dropout -> Linear, fused the same way
    h, stats = _fused_stage(h, params["mlp_w1"], n_valid=n_last, tm=tm,
                            stats=stats, gamma=gamma, beta=beta, compute_stats=True)
    out, _ = _fused_stage(h, params["mlp_w2"], n_valid=n_last, tm=tm,
                          stats=stats, gamma=params["mlp_g"], beta=params["mlp_beta"],
                          bias=params["mlp_b2"], compute_stats=False, out_dtype=jnp.float32)
    return out[:n_last, :out_channels]


# ---------------- pure-JAX reference (f32, unpadded) for a sanity check ----------------

def reference_forward(params, x, adj_sizes, in_channels, hidden_channels, out_channels):
    def bn_relu(h, g, b):
        m = jnp.mean(h, axis=0, keepdims=True)
        v = jnp.mean(h * h, axis=0, keepdims=True) - m * m
        return jnp.maximum((h - m) * jax.lax.rsqrt(v + BN_EPS) * g + b, 0.0)

    h = x.astype(jnp.bfloat16).astype(jnp.float32)
    d_in = in_channels
    for i, n in enumerate(adj_sizes):
        w = params[f"skip_w_{i}"][:d_in, :hidden_channels].astype(jnp.float32)
        h = bn_relu(h[:n] @ w,
                    params[f"norm_g_{i}"][:, :hidden_channels],
                    params[f"norm_b_{i}"][:, :hidden_channels])
        d_in = hidden_channels
    w1 = params["mlp_w1"][:hidden_channels, :hidden_channels].astype(jnp.float32)
    h = bn_relu(h @ w1, params["mlp_g"][:, :hidden_channels],
                params["mlp_beta"][:, :hidden_channels])
    w2 = params["mlp_w2"][:hidden_channels, :out_channels].astype(jnp.float32)
    b2 = params["mlp_b2"][:, :out_channels]
    return h @ w2 + b2


if __name__ == "__main__":
    N = 64                # total source nodes
    IN_CH = 16
    HIDDEN = 32
    OUT_CH = 16
    ADJ_SIZES = (48, 32)  # target-node counts per layer (num_layers = 2)

    params = init_encoder_params(jax.random.PRNGKey(42), IN_CH, HIDDEN, OUT_CH,
                                 num_layers=len(ADJ_SIZES))
    x = jax.random.normal(jax.random.PRNGKey(0), (N, IN_CH), jnp.float32)

    out = model_forward(params, x, ADJ_SIZES, HIDDEN, OUT_CH)
    out = jax.block_until_ready(out)
    assert out.shape == (ADJ_SIZES[-1], OUT_CH), out.shape

    ref = reference_forward(params, x, ADJ_SIZES, IN_CH, HIDDEN, OUT_CH)
    err = float(jnp.max(jnp.abs(out - ref)))
    assert err < 7.5e-2, f"max abs error vs reference: {err}"

    print("KERNEL_OK")
</pallas_src>

<mosaic_0001>
module attributes {stable_mosaic.version = 11 : i64} {
  func.func @kernel(%arg0: i32, %arg1: memref<48x128xbf16, #tpu.memory_space<vmem>>, %arg2: memref<128x128xbf16, #tpu.memory_space<vmem>>, %arg3: memref<48x128xbf16, #tpu.memory_space<vmem>>, %arg4: memref<2x128xf32, #tpu.memory_space<vmem>>, %arg5: memref<1x128xf32, #tpu.memory_space<vmem>>, %arg6: memref<1x128xf32, #tpu.memory_space<vmem>>) attributes {dimension_semantics = [#tpu.dimension_semantics<arbitrary>], iteration_bounds = array<i64: 1>, scalar_prefetch = 0 : i64, scratch_operands = 2 : i64, tpu.core_type = #tpu.core_type<tc>, window_params = [{transform_indices = @transform_0, window_bounds = array<i64: 48, 128>}, {pipeline_mode = #tpu.pipeline_mode<synchronous>, transform_indices = @transform_1, window_bounds = array<i64: 128, 128>}, {transform_indices = @transform_2, window_bounds = array<i64: 48, 128>}, {pipeline_mode = #tpu.pipeline_mode<synchronous>, transform_indices = @transform_3, window_bounds = array<i64: 2, 128>}]} {
    %c0 = arith.constant 0 : index
    %c0_0 = arith.constant 0 : index
    %0 = vector.load %arg1[%c0, %c0_0] : memref<48x128xbf16, #tpu.memory_space<vmem>>, vector<48x128xbf16>
    %c0_1 = arith.constant 0 : index
    %c0_2 = arith.constant 0 : index
    %1 = vector.load %arg2[%c0_1, %c0_2] : memref<128x128xbf16, #tpu.memory_space<vmem>>, vector<128x128xbf16>
    %cst = arith.constant dense<0.000000e+00> : vector<48x128xf32>
    %2 = tpu.matmul %0, %1, %cst {dimension_numbers = #tpu.dot_dimension_numbers<[1], [0], [0], [1], [0, 0, 1, 1], [], []>} : vector<48x128xbf16>, vector<128x128xbf16>, vector<48x128xf32> -> vector<48x128xf32>
    %3 = arith.truncf %2 : vector<48x128xf32> to vector<48x128xbf16>
    %c0_3 = arith.constant 0 : index
    %c0_4 = arith.constant 0 : index
    %4 = vector.load %arg3[%c0_3, %c0_4] : memref<48x128xbf16, #tpu.memory_space<vmem>>, vector<48x128xbf16>
    tpu.vector_store %arg3[%c0_3, %c0_4], %3 {strides = array<i32>} : memref<48x128xbf16, #tpu.memory_space<vmem>>, vector<48x128xbf16>,
    %5 = arith.extf %3 : vector<48x128xbf16> to vector<48x128xf32>
    %c0_i32 = arith.constant 0 : i32
    %6 = arith.cmpi eq, %arg0, %c0_i32 : i32
    %7 = arith.extui %6 : i1 to i32
    %c0_i32_5 = arith.constant 0 : i32
    %8 = arith.cmpi ne, %7, %c0_i32_5 : i32
    scf.if %8 {
      %cst_18 = arith.constant 0.000000e+00 : f32
      %23 = vector.broadcast %cst_18 : f32 to vector<1x128xf32>
      %c0_19 = arith.constant 0 : index
      %c0_20 = arith.constant 0 : index
      %24 = vector.load %arg5[%c0_19, %c0_20] : memref<1x128xf32, #tpu.memory_space<vmem>>, vector<1x128xf32>
      tpu.vector_store %arg5[%c0_19, %c0_20], %23 {strides = array<i32>} : memref<1x128xf32, #tpu.memory_space<vmem>>, vector<1x128xf32>,
      %cst_21 = arith.constant 0.000000e+00 : f32
      %25 = vector.broadcast %cst_21 : f32 to vector<1x128xf32>
      %c0_22 = arith.constant 0 : index
      %c0_23 = arith.constant 0 : index
      %26 = vector.load %arg6[%c0_22, %c0_23] : memref<1x128xf32, #tpu.memory_space<vmem>>, vector<1x128xf32>
      tpu.vector_store %arg6[%c0_22, %c0_23], %25 {strides = array<i32>} : memref<1x128xf32, #tpu.memory_space<vmem>>, vector<1x128xf32>,
    } else {
    }
    %c0_6 = arith.constant 0 : index
    %c0_7 = arith.constant 0 : index
    %9 = vector.load %arg5[%c0_6, %c0_7] : memref<1x128xf32, #tpu.memory_space<vmem>>, vector<1x128xf32>
    %cst_8 = arith.constant dense<0.000000e+00> : vector<128xf32>
    %10 = vector.multi_reduction <add>, %5, %cst_8 [0] : vector<48x128xf32> to vector<128xf32>
    %11 = vector.shape_cast %10 : vector<128xf32> to vector<1x128xf32>
    %12 = arith.addf %9, %11 : vector<1x128xf32>
    %c0_9 = arith.constant 0 : index
    %c0_10 = arith.constant 0 : index
    %13 = vector.load %arg5[%c0_9, %c0_10] : memref<1x128xf32, #tpu.memory_space<vmem>>, vector<1x128xf32>
    tpu.vector_store %arg5[%c0_9, %c0_10], %12 {strides = array<i32>} : memref<1x128xf32, #tpu.memory_space<vmem>>, vector<1x128xf32>,
    %c0_11 = arith.constant 0 : index
    %c0_12 = arith.constant 0 : index
    %14 = vector.load %arg6[%c0_11, %c0_12] : memref<1x128xf32, #tpu.memory_space<vmem>>, vector<1x128xf32>
    %15 = arith.mulf %5, %5 : vector<48x128xf32>
    %cst_13 = arith.constant dense<0.000000e+00> : vector<128xf32>
    %16 = vector.multi_reduction <add>, %15, %cst_13 [0] : vector<48x128xf32> to vector<128xf32>
    %17 = vector.shape_cast %16 : vector<128xf32> to vector<1x128xf32>
    %18 = arith.addf %14, %17 : vector<1x128xf32>
    %c0_14 = arith.constant 0 : index
    %c0_15 = arith.constant 0 : index
    %19 = vector.load %arg6[%c0_14, %c0_15] : memref<1x128xf32, #tpu.memory_space<vmem>>, vector<1x128xf32>
    tpu.vector_store %arg6[%c0_14, %c0_15], %18 {strides = array<i32>} : memref<1x128xf32, #tpu.memory_space<vmem>>, vector<1x128xf32>,
    %c0_i32_16 = arith.constant 0 : i32
    %20 = arith.cmpi eq, %arg0, %c0_i32_16 : i32
    %21 = arith.extui %20 : i1 to i32
    %c0_i32_17 = arith.constant 0 : i32
    %22 = arith.cmpi ne, %21, %c0_i32_17 : i32
    scf.if %22 {
      %c0_18 = arith.constant 0 : index
      %c0_19 = arith.constant 0 : index
      %23 = vector.load %arg5[%c0_18, %c0_19] : memref<1x128xf32, #tpu.memory_space<vmem>>, vector<1x128xf32>
      %cst_20 = arith.constant 0.020833334 : f32
      %24 = vector.broadcast %cst_20 : f32 to vector<1x128xf32>
      %25 = arith.mulf %23, %24 : vector<1x128xf32>
      %c0_21 = arith.constant 0 : index
      %c0_22 = arith.constant 0 : index
      %26 = vector.load %arg6[%c0_21, %c0_22] : memref<1x128xf32, #tpu.memory_space<vmem>>, vector<1x128xf32>
      %cst_23 = arith.constant 0.020833334 : f32
      %27 = vector.broadcast %cst_23 : f32 to vector<1x128xf32>
      %28 = arith.mulf %26, %27 : vector<1x128xf32>
      %29 = arith.mulf %25, %25 : vector<1x128xf32>
      %30 = arith.subf %28, %29 : vector<1x128xf32>
      %cst_24 = arith.constant 0.000000e+00 : f32
      %31 = vector.broadcast %cst_24 : f32 to vector<1x128xf32>
      %32 = arith.maximumf %30, %31 : vector<1x128xf32>
      %c0_25 = arith.constant 0 : index
      %c0_26 = arith.constant 0 : index
      %33 = vector.load %arg4[%c0_25, %c0_26] : memref<2x128xf32, #tpu.memory_space<vmem>>, vector<1x128xf32>
      tpu.vector_store %arg4[%c0_25, %c0_26], %25 {strides = array<i32>} : memref<2x128xf32, #tpu.memory_space<vmem>>, vector<1x128xf32>,
      %cst_27 = arith.constant 9.99999974E-6 : f32
      %34 = vector.broadcast %cst_27 : f32 to vector<1x128xf32>
      %35 = arith.addf %32, %34 : vector<1x128xf32>
      %36 = math.rsqrt %35 : vector<1x128xf32>
      %c1 = arith.constant 1 : index
      %c0_28 = arith.constant 0 : index
      %37 = vector.load %arg4[%c1, %c0_28] : memref<2x128xf32, #tpu.memory_space<vmem>>, vector<1x128xf32>
      tpu.vector_store %arg4[%c1, %c0_28], %36 {strides = array<i32>} : memref<2x128xf32, #tpu.memory_space<vmem>>, vector<1x128xf32>,
    } else {
    }
    return
  }
  func.func @transform_0(%arg0: i32) -> (i32, i32) {
    %c0_i32 = arith.constant 0 : i32
    %c0_i32_0 = arith.constant 0 : i32
    return %arg0, %c0_i32 : i32, i32
  }
  func.func @transform_1(%arg0: i32) -> (i32, i32) {
    %c0_i32 = arith.constant 0 : i32
    %c0_i32_0 = arith.constant 0 : i32
    %c0_i32_1 = arith.constant 0 : i32
    return %c0_i32, %c0_i32_0 : i32, i32
  }
  func.func @transform_2(%arg0: i32) -> (i32, i32) {
    %c0_i32 = arith.constant 0 : i32
    %c0_i32_0 = arith.constant 0 : i32
    return %arg0, %c0_i32 : i32, i32
  }
  func.func @transform_3(%arg0: i32) -> (i32, i32) {
    %c0_i32 = arith.constant 0 : i32
    %c0_i32_0 = arith.constant 0 : i32
    %c0_i32_1 = arith.constant 0 : i32
    return %c0_i32, %c0_i32_0 : i32, i32
  }
}

</mosaic_0001>

<llo_original>
// kernel: tpu_custom_call.1
$region0: #{tpu_custom_call.1}
  #allocation0 [shape = 'u32[]', space=smem, size = 0x4, offset = 0x4, fixed_abs, tag = 'smem constant byte address 0x4 - core index']
  #allocation1 [shape = 'u32[72,128]{1,0:T(1,128)}', space=vmem, size = 0x9000, scoped, tag = 'internal scratch']
  #allocation2 [shape = 'f32[1,128]{1,0:T(1,128)}', space=vmem, size = 0x200, scoped, tag = 'scratch operand']
  #allocation3 [shape = 'f32[1,128]{1,0:T(1,128)}', space=vmem, size = 0x200, scoped, tag = 'scratch operand']
  %s0 = inlined_call_operand.hbm [shape: bf16[48,128], index: 0, kind: input, shape index: {}]
  %s1 = inlined_call_operand.hbm [shape: bf16[128,128], index: 1, kind: input, shape index: {}]
  %s2 = inlined_call_operand.hbm [shape: bf16[48,128], index: 2, kind: output, shape index: {0}]
  %s3 = inlined_call_operand.hbm [shape: f32[2,128], index: 3, kind: output, shape index: {1}]
  %4 = xla_tuple %s2, %s3
  %s5 = sld [smem:[#allocation0]]
  $region42: #{tpu_custom_call.1} parent=0
    _
  %s7 = ssub.s32 1, %s5
  %s8 = scalar_select 0, %s7, %s5
  $region1: #{tpu_custom_call.1} parent=0
    #allocation4 [shape = 'u8[12288]{0}', space=vmem, size = 0x3000, scoped, tag = 'input window, operand 0, single buffered']
    #allocation5 [shape = 's32[1]{0}', space=sflag, size = 0x4, scoped, tag = 'scoped memory for tpu_custom_call.1']
    #allocation6 [shape = 's32[1]{0}', space=sflag, size = 0x4, scoped, tag = 'scoped memory for tpu_custom_call.1']
    #allocation7 [shape = 'u8[32768]{0}', space=vmem, size = 0x8000, scoped, tag = 'input window, operand 1, single buffered']
    #allocation8 [shape = 's32[1]{0}', space=sflag, size = 0x4, scoped, tag = 'scoped memory for tpu_custom_call.1']
    #allocation9 [shape = 'u8[12288]{0}', space=vmem, size = 0x3000, scoped, tag = 'output window, operand 0, single buffered']
    #allocation10 [shape = 'u8[1024]{0}', space=vmem, size = 0x400, scoped, tag = 'output window, operand 1, single buffered']
    #allocation11 [shape = 's32[1]{0}', space=sflag, size = 0x4, scoped, tag = 'scoped memory for tpu_custom_call.1']
    %9 = vsyncpa [#allocation5], 0
    %10 = vsyncpa [#allocation8], 0
    %11 = vsyncpa [#allocation6], 0
    %12 = vsyncpa [#allocation11], 0
    // Predicated region
    $region2: #{tpu_custom_call.1} parent=1 // pred_check
      _
    $region3: #{tpu_custom_call.1} parent=1 // pred_check_branch
      %14 = sbr.rel (0) target = $region5
    $region4: #{tpu_custom_call.1} parent=1 // pred_region
      %16 = vsyncadd [#allocation5], 0
      %s17 = sshll.u32 %s0, 4
      %s18 = int_to_ptr.hbm [resolvable:$true] %s17
      %s19 = sshll.u32 [#allocation4], 4
      %s20 = int_to_ptr.vmem [resolvable:$true] %s19
      %25 = dma.hbm_to_vmem [thread:$0]  %s18, 384, %s20, [#allocation5], 64, 64, 4
    $region5: #{tpu_custom_call.1} parent=1 // pred_fallthru
      _
    // Predicated region
    $region6: #{tpu_custom_call.1} parent=1 // pred_check
      _
    $region7: #{tpu_custom_call.1} parent=1 // pred_check_branch
      %27 = sbr.rel (0) target = $region9
    $region8: #{tpu_custom_call.1} parent=1 // pred_region
      %29 = vsyncadd [#allocation8], 0
      %s30 = sshll.u32 %s1, 4
      %s31 = int_to_ptr.hbm [resolvable:$true] %s30
      %s32 = sshll.u32 [#allocation7], 4
      %s33 = int_to_ptr.vmem [resolvable:$true] %s32
      %38 = dma.hbm_to_vmem [thread:$0]  %s31, 1024, %s33, [#allocation8], 64, 64, 4
    $region9: #{tpu_custom_call.1} parent=1 // pred_fallthru
      _
    // Predicated region
    $region10: #{tpu_custom_call.1} parent=1 // pred_check
      _
    $region11: #{tpu_custom_call.1} parent=1 // pred_check_branch
      %40 = sbr.rel (0) target = $region13
    $region12: #{tpu_custom_call.1} parent=1 // pred_region
      %42 = dma.done [#allocation5], 384
    $region13: #{tpu_custom_call.1} parent=1 // pred_fallthru
      _
    // Predicated region
    $region14: #{tpu_custom_call.1} parent=1 // pred_check
      _
    $region15: #{tpu_custom_call.1} parent=1 // pred_check_branch
      %44 = sbr.rel (0) target = $region17
    $region16: #{tpu_custom_call.1} parent=1 // pred_region
      %46 = dma.done [#allocation8], 1024
    $region17: #{tpu_custom_call.1} parent=1 // pred_fallthru
      _
    %v47 = vld [vmem:[#allocation4] sm:$0xf]
    %v48 = vld [vmem:[#allocation4 + $0x4] sm:$0xf]
    %v49 = vld [vmem:[#allocation4 + $0x8] sm:$0xf]
    %v50 = vld [vmem:[#allocation4 + $0xc] sm:$0xf]
    %v51 = vld [vmem:[#allocation4 + $0x10] sm:$0xf]
    %v52 = vld [vmem:[#allocation4 + $0x14] sm:$0xf]
    %v53 = vld [vmem:[#allocation7] sm:$0xf]
    %v54 = vld [vmem:[#allocation7 + $0x4] sm:$0xf]
    %v55 = vld [vmem:[#allocation7 + $0x8] sm:$0xf]
    %v56 = vld [vmem:[#allocation7 + $0xc] sm:$0xf]
    %v57 = vld [vmem:[#allocation7 + $0x10] sm:$0xf]
    %v58 = vld [vmem:[#allocation7 + $0x14] sm:$0xf]
    %v59 = vld [vmem:[#allocation7 + $0x18] sm:$0xf]
    %v60 = vld [vmem:[#allocation7 + $0x1c] sm:$0xf]
    %v61 = vld [vmem:[#allocation7 + $0x20] sm:$0xf]
    %v62 = vld [vmem:[#allocation7 + $0x24] sm:$0xf]
    %v63 = vld [vmem:[#allocation7 + $0x28] sm:$0xf]
    %v64 = vld [vmem:[#allocation7 + $0x2c] sm:$0xf]
    %v65 = vld [vmem:[#allocation7 + $0x30] sm:$0xf]
    %v66 = vld [vmem:[#allocation7 + $0x34] sm:$0xf]
    %v67 = vld [vmem:[#allocation7 + $0x38] sm:$0xf]
    %v68 = vld [vmem:[#allocation7 + $0x3c] sm:$0xf]
    %v75 = vunpack.c.l.b16 %v47
    %v76 = vunpack.c.l.b16 %v48
    %v77 = vunpack.c.l.b16 %v49
    %v78 = vunpack.c.l.b16 %v50
    %v79 = vunpack.c.l.b16 %v51
    %v80 = vunpack.c.l.b16 %v52
    %v81 = vpack.c.b16 %v76, %v75
    %v82 = vpack.c.b16 %v78, %v77
    %v83 = vpack.c.b16 %v80, %v79
    %v103 = vunpack.c.l.b16 %v53
    %v104 = vunpack.c.l.b16 %v54
    %v105 = vunpack.c.l.b16 %v55
    %v106 = vunpack.c.l.b16 %v56
    %v107 = vunpack.c.l.b16 %v57
    %v108 = vunpack.c.l.b16 %v58
    %v109 = vunpack.c.l.b16 %v59
    %v110 = vunpack.c.l.b16 %v60
    %v111 = vunpack.c.l.b16 %v61
    %v112 = vunpack.c.l.b16 %v62
    %v113 = vunpack.c.l.b16 %v63
    %v114 = vunpack.c.l.b16 %v64
    %v115 = vunpack.c.l.b16 %v65
    %v116 = vunpack.c.l.b16 %v66
    %v117 = vunpack.c.l.b16 %v67
    %v118 = vunpack.c.l.b16 %v68
    %v119 = vpack.c.b16 %v104, %v103
    %v120 = vpack.c.b16 %v106, %v105
    %v121 = vpack.c.b16 %v108, %v107
    %v122 = vpack.c.b16 %v110, %v109
    %v123 = vpack.c.b16 %v112, %v111
    %v124 = vpack.c.b16 %v114, %v113
    %v125 = vpack.c.b16 %v116, %v115
    %v126 = vpack.c.b16 %v118, %v117
    %135 = vmatpush.bf16.msra.mxu0 %v126
    %136 = vmatpush.bf16.msra.mxu0 %v125
    %137 = vmatpush.bf16.msra.mxu0 %v124
    %138 = vmatpush.bf16.msra.mxu0 %v123
    %139 = vmatpush.bf16.msra.mxu0 %v122
    %140 = vmatpush.bf16.msra.mxu0 %v121
    %141 = vmatpush.bf16.msra.mxu0 %v120
    %142 = vmatpush.bf16.msra.mxu0 %v119
    %143 = vmatmul.bf16.gmra.mxu0 %v81
    %v144 = vpop.f32.mrf.mxu0
    %v145 = vadd.f32 0.0, %v144
    %v146 = vpop.f32.mrf.mxu0
    %v147 = vadd.f32 0.0, %v146
    %148 = vmatmul.bf16.gmra.mxu0 %v82
    %v149 = vpop.f32.mrf.mxu0
    %v150 = vadd.f32 0.0, %v149
    %v151 = vpop.f32.mrf.mxu0
    %v152 = vadd.f32 0.0, %v151
    %153 = vmatmul.bf16.gmra.mxu0 %v83
    %v154 = vpop.f32.mrf.mxu0
    %v155 = vadd.f32 0.0, %v154
    %v156 = vpop.f32.mrf.mxu0
    %v157 = vadd.f32 0.0, %v156
    %158 = vdwg.mxu0
    %v159 = vpack.c.bf16 %v145, %v145
    %v160 = vpack.c.bf16 %v147, %v147
    %v161 = vpack.c.bf16 %v150, %v150
    %v162 = vpack.c.bf16 %v152, %v152
    %v163 = vpack.c.bf16 %v155, %v155
    %v164 = vpack.c.bf16 %v157, %v157
    %165 = vst [vmem:[#allocation9] sm:$0xf] %v159
    %166 = vst [vmem:[#allocation9 + $0x4] sm:$0xf] %v160
    %167 = vst [vmem:[#allocation9 + $0x8] sm:$0xf] %v161
    %168 = vst [vmem:[#allocation9 + $0xc] sm:$0xf] %v162
    %169 = vst [vmem:[#allocation9 + $0x10] sm:$0xf] %v163
    %170 = vst [vmem:[#allocation9 + $0x14] sm:$0xf] %v164
    %v171 = vunpack.c.l.bf16 %v159
    %v172 = vunpack.c.l.bf16 %v160
    %v173 = vunpack.c.l.bf16 %v161
    %v174 = vunpack.c.l.bf16 %v162
    %v175 = vunpack.c.l.bf16 %v163
    %v176 = vunpack.c.l.bf16 %v164
    %p177 = scmp.eq.s32.totalorder 0, 0
    // Predicated region
    $region18: #{tpu_custom_call.1} parent=1 // pred_check
      %p178 = pneg %p177
    $region19: #{tpu_custom_call.1} parent=1 // pred_check_branch
      %180 = sbr.rel (%p178) target = $region21
    $region20: #{tpu_custom_call.1} parent=1 // pred_region
      %181 = vst [vmem:[#allocation2] sm:$0x1] 0.0
      %182 = vst [vmem:[#allocation3] sm:$0x1] 0.0
    $region21: #{tpu_custom_call.1} parent=1 // pred_fallthru
      _
    %v183 = vld [vmem:[#allocation2] sm:$0x1]
    %v184 = vadd.f32 %v171, %v172
    %v185 = vadd.f32 %v184, %v173
    %v186 = vadd.f32 %v185, %v174
    %v187 = vadd.f32 %v186, %v175
    %v188 = vadd.f32 %v187, %v176
    %v189 = vrot.slane %v188, 4
    %v190 = vadd.f32 %v188, %v189
    %v191 = vrot.slane %v190, 2
    %v192 = vadd.f32 %v190, %v191
    %v193 = vrot.slane %v192, 1
    %v194 = vadd.f32 %v192, %v193
    %v195 = vadd.f32 %v183, %v194
    %196 = vst [vmem:[#allocation2] sm:$0x1] %v195
    %v197 = vld [vmem:[#allocation3] sm:$0x1]
    %v198 = vmul.f32 %v171, %v171
    %v199 = vmul.f32 %v172, %v172
    %v200 = vmul.f32 %v173, %v173
    %v201 = vmul.f32 %v174, %v174
    %v202 = vmul.f32 %v175, %v175
    %v203 = vmul.f32 %v176, %v176
    %v204 = vadd.f32 %v198, %v199
    %v205 = vadd.f32 %v204, %v200
    %v206 = vadd.f32 %v205, %v201
    %v207 = vadd.f32 %v206, %v202
    %v208 = vadd.f32 %v207, %v203
    %v209 = vrot.slane %v208, 4
    %v210 = vadd.f32 %v208, %v209
    %v211 = vrot.slane %v210, 2
    %v212 = vadd.f32 %v210, %v211
    %v213 = vrot.slane %v212, 1
    %v214 = vadd.f32 %v212, %v213
    %v215 = vadd.f32 %v197, %v214
    %216 = vst [vmem:[#allocation3] sm:$0x1] %v215
    // Predicated region
    $region22: #{tpu_custom_call.1} parent=1 // pred_check
      %p217 = pneg %p177
    $region23: #{tpu_custom_call.1} parent=1 // pred_check_branch
      %219 = sbr.rel (%p217) target = $region25
    $region24: #{tpu_custom_call.1} parent=1 // pred_region
      %v220 = vld [vmem:[#allocation2] sm:$0x1]
      %v221 = vmul.f32 %v220, 0.020833334
      %v222 = vld [vmem:[#allocation3] sm:$0x1]
      %v223 = vmul.f32 %v222, 0.020833334
      %v224 = vmul.f32 %v221, %v221
      %v225 = vsub.f32 %v223, %v224
      %v226 = vmax.f32 %v225, 0.0
      %227 = vst [vmem:[#allocation10] sm:$0x1] %v221
      %v228 = vadd.f32 %v226, 1e-05
      %v229 = vrsqrt.pop %v228
      %v230 = vmul.f32 %v229, %v228
      %v231 = vmul.f32 %v230, %v229
      %v232 = vmul.f32 0.5, %v231
      %v233 = vsub.f32 1.5, %v232
      %v234 = vmul.f32 %v229, %v233
      %vm235 = vweird.f32 %v228
      %vm236 = vweird.f32 %v229
      %vm237 = vmor %vm235, %vm236
      %v238 = vsel %vm237, %v229, %v234
      %239 = vst [vmem:[#allocation10 + $0x1] sm:$0x1] %v238
    $region25: #{tpu_custom_call.1} parent=1 // pred_fallthru
      _
    // Predicated region
    $region26: #{tpu_custom_call.1} parent=1 // pred_check
      _
    $region27: #{tpu_custom_call.1} parent=1 // pred_check_branch
      %241 = sbr.rel (0) target = $region29
    $region28: #{tpu_custom_call.1} parent=1 // pred_region
      %243 = vsyncadd [#allocation6], 0
      %s244 = sshll.u32 [#allocation9], 4
      %s245 = int_to_ptr.vmem [resolvable:$true] %s244
      %s246 = sshll.u32 %s2, 4
      %s247 = int_to_ptr.hbm [resolvable:$true] %s246
      %252 = dma.vmem_to_hbm [thread:$0]  %s245, 384, %s247, [#allocation6], 64, 64, 4
    $region29: #{tpu_custom_call.1} parent=1 // pred_fallthru
      _
    // Predicated region
    $region30: #{tpu_custom_call.1} parent=1 // pred_check
      _
    $region31: #{tpu_custom_call.1} parent=1 // pred_check_branch
      %254 = sbr.rel (0) target = $region33
    $region32: #{tpu_custom_call.1} parent=1 // pred_region
      %256 = vsyncadd [#allocation11], 0
      %s258 = sshll.u32 [#allocation10], 4
      %s259 = int_to_ptr.vmem [resolvable:$true] %s258
      %s260 = sshll.u32 %s3, 4
      %s261 = int_to_ptr.hbm [resolvable:$true] %s260
      %263 = dma.vmem_to_hbm [thread:$0]  %s259, 32, %s261, [#allocation11]
    $region33: #{tpu_custom_call.1} parent=1 // pred_fallthru
      _
    // Predicated region
    $region34: #{tpu_custom_call.1} parent=1 // pred_check
      _
    $region35: #{tpu_custom_call.1} parent=1 // pred_check_branch
      %265 = sbr.rel (0) target = $region37
    $region36: #{tpu_custom_call.1} parent=1 // pred_region
      %267 = dma.done [#allocation6], 384
    $region37: #{tpu_custom_call.1} parent=1 // pred_fallthru
      _
    // Predicated region
    $region38: #{tpu_custom_call.1} parent=1 // pred_check
      _
    $region39: #{tpu_custom_call.1} parent=1 // pred_check_branch
      %269 = sbr.rel (0) target = $region41
    $region40: #{tpu_custom_call.1} parent=1 // pred_region
      %271 = dma.done [#allocation11], 32
    $region41: #{tpu_custom_call.1} parent=1 // pred_fallthru
      _
    %272 = vsyncpa [#allocation5], 1
    %273 = vsyncpa [#allocation8], 1
    %274 = vsyncpa [#allocation6], 1
    %275 = vsyncpa [#allocation11], 1

</llo_original>
